<compile_context>
chip_gen: v7x
topology: tpu7x:2x2x1
jax: 0.10.0
libtpu: 0.0.40
codegen_flags: <defaults>
</compile_context>

<pallas_src>
import jax
import jax.numpy as jnp
from jax import lax
from jax.experimental import pallas as pl
from jax.experimental.pallas import tpu as pltpu

_VMEM = pltpu.MemorySpace.VMEM
_SMEM = pltpu.MemorySpace.SMEM


# ----------------------------------------------------------------------------
# Kernel 1: fused ct_hm head (VPU 1x1 conv on 4x-pooled features) + focal stats
# ----------------------------------------------------------------------------

def _make_hm_focal_kernel(cin, nc):
    def kernel(x_ref, gt_ref, w_ref, b_ref, hm_ref, st_ref):
        x = x_ref[...].astype(jnp.float32)       # (bB, cin, P)
        g = gt_ref[...].astype(jnp.float32)      # (bB, nc,  P)
        w = w_ref[...]                           # (cin, nc, 1)
        b = b_ref[...]                           # (nc, 1)

        # 1x1 conv as `cin` broadcast FMAs over ALL classes at once (pure VPU;
        # an MXU matmul with K=cin would waste >98% of the array).
        acc = x[:, 0:1, :] * w[0][None]
        for c in range(1, cin):
            acc = acc + x[:, c:c + 1, :] * w[c][None]
        logits = acc + b[None]                   # (bB, nc, P)
        hm_ref[...] = logits.astype(hm_ref.dtype)

        # sigmoid + clamp(1e-4, 1 - 1e-4) mirrors the e2ec `sigmoid` helper.
        p = jnp.clip(1.0 / (1.0 + jnp.exp(-logits)), 1e-4, 1.0 - 1e-4)
        pos = (g == 1.0).astype(jnp.float32)
        neg = (g < 1.0).astype(jnp.float32)
        neg_w = (1.0 - g) ** 4
        # CornerNet focal partial sums for this batch block: 3 reductions.
        st_ref[0, 0] = jnp.sum(jnp.log(p) * (1.0 - p) ** 2 * pos)
        st_ref[0, 1] = jnp.sum(jnp.log(1.0 - p) * (p * p) * neg_w * neg)
        st_ref[0, 2] = jnp.sum(pos)

    return kernel


def _hm_head_focal(pooled, gt_hm, w, b):
    B, cin, Hc, Wc = pooled.shape
    nc = w.shape[1]
    P = Hc * Wc
    # Lane-dense layout: fold (Hc, Wc) into one last axis (contiguous reshape,
    # free view, no HBM copy).  For production nc~80, Hc=Wc=128 add a class
    # tile axis to keep blocks inside v7x's smaller VMEM.
    xs = jnp.asarray(pooled, jnp.float32).reshape(B, cin, P)
    gs = jnp.asarray(gt_hm, jnp.float32).reshape(B, nc, P)
    w3 = jnp.asarray(w, jnp.float32).reshape(cin, nc, 1)
    b2 = jnp.asarray(b, jnp.float32).reshape(nc, 1)

    # Block several batch elements per step (amortize ~0.35us/step overhead)
    # while keeping the double-buffered footprint well under scoped VMEM.
    per_elem = 4 * P * (cin + 2 * nc)
    budget = 2 << 20
    bB = 1
    for cand in range(B, 0, -1):
        if B % cand == 0 and per_elem * cand * 2 <= budget:
            bB = cand
            break
    steps = B // bB

    hm, stats = pl.pallas_call(
        _make_hm_focal_kernel(cin, nc),
        grid=(steps,),
        in_specs=[
            pl.BlockSpec((bB, cin, P), lambda i: (i, 0, 0)),
            pl.BlockSpec((bB, nc, P), lambda i: (i, 0, 0)),
            pl.BlockSpec((cin, nc, 1), lambda i: (0, 0, 0)),
            pl.BlockSpec((nc, 1), lambda i: (0, 0)),
        ],
        out_specs=(
            pl.BlockSpec((bB, nc, P), lambda i: (i, 0, 0)),
            pl.BlockSpec((1, 3), lambda i: (i, 0), memory_space=_SMEM),
        ),
        out_shape=(
            jax.ShapeDtypeStruct((B, nc, P), jnp.float32),
            jax.ShapeDtypeStruct((steps, 3), jnp.float32),
        ),
        compiler_params=pltpu.CompilerParams(
            # per-step partial stats -> safe to shard across v7x's two TCs.
            dimension_semantics=("parallel",)),
    )(xs, gs, w3, b2)
    return hm.reshape(B, nc, Hc, Wc), jnp.sum(stats, axis=0)


# ----------------------------------------------------------------------------
# Kernel 2: fused small-tensor stats (poly smooth_l1 sums, keypoint BCE sums,
# DM matching + masked smooth_l1).  Tiny work: the win is one launch and a
# single load of each shared target.
# ----------------------------------------------------------------------------

def _make_small_stats_kernel(n_poly, n_kp, with_dm):
    def kernel(*refs):
        out_ref = refs[-1]
        polys_ref, pgt_ref = refs[0], refs[1]
        pos = 2

        # per-evolution smooth_l1 sums against one shared gt load.
        d = polys_ref[...] - pgt_ref[...]
        ad = jnp.abs(d)
        sl1 = jnp.where(ad < 1.0, 0.5 * d * d, ad - 0.5)
        for i in range(n_poly):
            out_ref[0, i] = jnp.sum(sl1[i:i + 1])

        # keypoint BCE sums (two-term form kept: targets may be soft).
        if n_kp:
            kp_ref, kpt_ref = refs[pos], refs[pos + 1]
            pos += 2
            p = jnp.clip(kp_ref[...], 1e-7, 1.0 - 1e-7)
            t = kpt_ref[...]
            bce = -(t * jnp.log(p) + (1.0 - t) * jnp.log(1.0 - p))
            for j in range(n_kp):
                out_ref[0, n_poly + j] = jnp.sum(bce[j:j + 1])

        # DM matching (nearest interpolated gt point, ties averaged) + masked
        # smooth_l1.  The (P, N, N*interp) distance tensor stays in VMEM/vregs.
        if with_dm:
            pts = refs[pos][...]       # (5, P, N): init_x/y, pred_x/y, key_mask
            gxy = refs[pos + 1][...]   # (2, P, N*interp)
            ax, ay = pts[0], pts[1]
            px, py = pts[2], pts[3]
            m = pts[4]
            gx, gy = gxy[0], gxy[1]
            d2 = ((ax[:, :, None] - gx[:, None, :]) ** 2
                  + (ay[:, :, None] - gy[:, None, :]) ** 2)
            mn = jnp.min(d2, axis=-1, keepdims=True)
            wgt = (d2 <= mn).astype(jnp.float32)
            wgt = wgt / jnp.sum(wgt, axis=-1, keepdims=True)
            tx = jnp.sum(wgt * gx[:, None, :], axis=-1)
            ty = jnp.sum(wgt * gy[:, None, :], axis=-1)

            def _sl(z):
                az = jnp.abs(z)
                return jnp.where(az < 1.0, 0.5 * z * z, az - 0.5)

            out_ref[0, n_poly + n_kp] = jnp.sum(
                (_sl(px - tx) + _sl(py - ty)) * m)
            out_ref[0, n_poly + n_kp + 1] = jnp.sum(m)

    return kernel


def _small_stats(poly_terms, gt_polys, kp_heads, kp_target, dm_args):
    S, K = len(poly_terms), len(kp_heads)
    with_dm = dm_args is not None
    inputs = [
        jnp.stack([jnp.asarray(p, jnp.float32).reshape(-1)
                   for p in poly_terms], axis=0),
        jnp.asarray(gt_polys, jnp.float32).reshape(1, -1),
    ]
    if K:
        inputs.append(jnp.stack([jnp.asarray(k, jnp.float32).reshape(-1)
                                 for k in kp_heads], axis=0))
        inputs.append(jnp.asarray(kp_target, jnp.float32).reshape(1, -1))
    if with_dm:
        ini, prd, gint, km = [jnp.asarray(a, jnp.float32) for a in dm_args]
        # Pack the 7 tiny DM inputs into 2 stacked arrays -> 2 DMAs, not 7.
        inputs.append(jnp.stack([ini[..., 0], ini[..., 1],
                                 prd[..., 0], prd[..., 1], km], axis=0))
        inputs.append(jnp.stack([gint[..., 0], gint[..., 1]], axis=0))
    n_out = S + K + (2 if with_dm else 0)
    # TODO(synk): this one-shot kernel could be folded into step 0 of the
    # mask/edge kernel to save one launch; kept separate for clarity.
    out = pl.pallas_call(
        _make_small_stats_kernel(S, K, with_dm),
        out_shape=jax.ShapeDtypeStruct((1, n_out), jnp.float32),
        in_specs=[pl.BlockSpec(memory_space=_VMEM)] * len(inputs),
        out_specs=pl.BlockSpec(memory_space=_SMEM),
    )(*inputs)
    return out[0]


def _interp_gt(gt_poly, interp=4):
    gt_roll = jnp.roll(gt_poly, shift=1, axis=1)
    step = jnp.arange(interp, dtype=jnp.float32) / float(interp)
    gi = (gt_poly[:, :, None, :] * step[None, None, :, None]
          + gt_roll[:, :, None, :] * (1.0 - step)[None, None, :, None])
    P, N = gt_poly.shape[0], gt_poly.shape[1]
    return gi.reshape(P, N * interp, 2)


# ----------------------------------------------------------------------------
# Kernel 3: fused, tiled BCE+Dice stats over the mask / edge heads.
# ----------------------------------------------------------------------------

def _make_mask_edge_kernel(n_bce, n_dice, tile_r, cols, rows_total, need_mask):
    n_out = 3 * n_bce + 2 * n_dice + (1 if n_bce else 0) + (1 if n_dice else 0)

    def kernel(*refs):
        out_ref = refs[-1]
        bce_preds = refs[:n_bce]
        dice_preds = refs[n_bce:n_bce + n_dice]
        pos = n_bce + n_dice
        tb_ref = td_ref = None
        if n_bce:
            tb_ref = refs[pos]
            pos += 1
        if n_dice:
            td_ref = refs[pos]
            pos += 1

        if need_mask:
            row = (lax.broadcasted_iota(jnp.int32, (tile_r, cols), 0)
                   + pl.program_id(0) * tile_r)
            valid = row < rows_total

        def _load(r):
            # storage/DMA dtype may be bf16; compute dtype is always f32.
            v = r[...].astype(jnp.float32)
            if need_mask:
                v = jnp.where(valid, v, 0.0)
            return v

        o = 0
        if n_bce:
            tb = _load(tb_ref)
            for r in bce_preds:
                pr = _load(r)
                p = jnp.clip(pr, 1e-7, 1.0 - 1e-7)
                # binary-target identity: BCE = -log(p if t==1 else 1-p).
                # One EUP log/element instead of two (exact only for 0/1
                # targets; soft targets would need the two-term form).
                bce = -jnp.log(jnp.where(tb >= 0.5, p, 1.0 - p))
                if need_mask:
                    bce = jnp.where(valid, bce, 0.0)
                out_ref[0, o] = jnp.sum(bce)
                out_ref[0, o + 1] = jnp.sum(pr * tb)
                out_ref[0, o + 2] = jnp.sum(pr)
                o += 3
            out_ref[0, o] = jnp.sum(tb)     # loop-invariant target sum, hoisted
            o += 1
        if n_dice:
            td = _load(td_ref)
            for r in dice_preds:
                pr = _load(r)
                out_ref[0, o] = jnp.sum(pr * td)
                out_ref[0, o + 1] = jnp.sum(pr)
                o += 2
            out_ref[0, o] = jnp.sum(td)     # loop-invariant target sum, hoisted
            o += 1

    return kernel, n_out


def _mask_edge_stats(mask_preds, mask_target, edge_preds, edge_target,
                     tile_rows=512):
    # All mask/edge heads and their targets share one spatial shape.
    n_bce, n_dice = len(mask_preds), len(edge_preds)
    ref_t = mask_target if n_bce else edge_target
    shape = ref_t.shape
    n_elems = 1
    for s in shape:
        n_elems *= int(s)

    # Copy-free 2D view: lane-dense (N/128, 128) when possible, otherwise the
    # natural (rows, last_dim) layout.  Never a jnp.pad copy -- any ragged row
    # tail is handled in-kernel with an iota mask instead.
    if n_elems % 128 == 0:
        rows, cols = n_elems // 128, 128
    else:
        cols = int(shape[-1])
        rows = n_elems // cols

    def prep(x):
        return x.reshape(rows, cols)     # contiguous reshape: view, no cast

    arrays = [prep(x) for x in mask_preds] + [prep(x) for x in edge_preds]
    if n_bce:
        arrays.append(prep(mask_target))
    if n_dice:
        arrays.append(prep(edge_target))

    # tile cap 512 rows keeps the double-buffered footprint to a few MiB, well
    # inside the default scoped-VMEM limit on every generation (incl. v5e).
    tile_r = rows if rows <= tile_rows else tile_rows
    steps = -(-rows // tile_r)
    need_mask = (rows % tile_r) != 0

    kernel, n_out = _make_mask_edge_kernel(n_bce, n_dice, tile_r, cols, rows,
                                           need_mask)
    out = pl.pallas_call(
        kernel,
        grid=(steps,),
        in_specs=[pl.BlockSpec((tile_r, cols), lambda i: (i, 0))] * len(arrays),
        out_specs=pl.BlockSpec((1, n_out), lambda i: (i, 0),
                               memory_space=_SMEM),
        out_shape=jax.ShapeDtypeStruct((steps, n_out), jnp.float32),
        compiler_params=pltpu.CompilerParams(
            # per-step partial rows -> "parallel" is safe; v7x uses both TCs.
            dimension_semantics=("parallel",)),
    )(*arrays)
    return jnp.sum(out, axis=0), float(n_elems)


# ----------------------------------------------------------------------------
# Synthetic net (deterministic): pooled features + Pallas head, fixed
# deterministic outputs for the polygon / keypoint / mask / edge heads.
# ----------------------------------------------------------------------------

class SyntheticNet:
    def __init__(self, key, num_classes, num_polys, num_points, n_evolve,
                 n_keypoint_heads, n_edge_heads, batch_size, hw):
        ks = jax.random.split(key, 12)
        self.num_classes = num_classes
        self.w_hm = 0.1 * jax.random.normal(ks[0], (3, num_classes), jnp.float32)
        self.b_hm = 0.01 * jax.random.normal(ks[1], (1, num_classes), jnp.float32)
        H = W = hw
        self.fixed = {
            'poly_init': 4.0 * jax.random.normal(ks[2], (num_polys, num_points, 2)),
            'poly_coarse': 4.0 * jax.random.normal(ks[3], (num_polys, num_points, 2)),
            'py_pred': [4.0 * jax.random.normal(ks[4 + i], (num_polys, num_points, 2))
                        for i in range(n_evolve)],
            'keypoint': [jax.random.uniform(ks[8 + i], (num_polys, num_points),
                                            minval=0.05, maxval=0.95)
                         for i in range(n_keypoint_heads)],
            # mask / edge heads are streamed into the loss kernel as bf16
            # (halves HBM traffic of the mem-bound kernel; compute stays f32).
            'mask_batch_init': jax.random.uniform(
                ks[10], (batch_size, 1, H, W), minval=0.05,
                maxval=0.95).astype(jnp.bfloat16),
            'mask_batch_coarse': jax.random.uniform(
                ks[11], (batch_size, 1, H, W), minval=0.05,
                maxval=0.95).astype(jnp.bfloat16),
        }
        self.fixed['egde_result'] = [
            jax.random.uniform(jax.random.fold_in(key, 100 + i),
                               (batch_size, 1, H, W), minval=0.05,
                               maxval=0.95).astype(jnp.bfloat16)
            for i in range(n_edge_heads)]

    def pooled_features(self, inp):
        B, C, H, W = inp.shape
        Hc, Wc = H // 4, W // 4
        # 4x average pool in XLA glue (16x data reduction before the kernel);
        # stays in NCHW so the fused head never needs a transpose.
        return inp.reshape(B, C, Hc, 4, Wc, 4).mean(axis=(3, 5)).astype(jnp.float32)

    def hm_head_and_focal(self, pooled, gt_hm):
        return _hm_head_focal(pooled, gt_hm, self.w_hm, self.b_hm)

    def assemble_output(self, ct_hm, batch):
        out = dict(self.fixed)
        out['ct_hm'] = ct_hm                       # logits (NCHW, PyTorch layout)
        out['img_gt_polys'] = batch['img_gt_polys']
        return out

    def __call__(self, inp, batch):
        # test-mode path: head only (focal stats against a dummy gt, ignored).
        pooled = self.pooled_features(inp)
        dummy_gt = jnp.full((pooled.shape[0], self.num_classes,
                             pooled.shape[2], pooled.shape[3]), 2.0, jnp.float32)
        ct_hm, _ = self.hm_head_and_focal(pooled, dummy_gt)
        return self.assemble_output(ct_hm, batch)


# ----------------------------------------------------------------------------
# NetworkWrapper forward (mirrors the PyTorch control flow)
# ----------------------------------------------------------------------------

class NetworkWrapper:
    def __init__(self, net, with_dml=True, start_epoch=10, weight_dict=None):
        self.with_dml = with_dml
        self.net = net
        self.weight_dict = weight_dict
        self.start_epoch = start_epoch

    def __call__(self, batch):
        if 'test' in batch['meta']:
            return self.net(batch['inp'], batch)

        epoch = batch['epoch']
        scalar_stats = {}
        loss = jnp.float32(0.0)

        # fused pooled-features -> 1x1-conv head -> focal stats (kernel 1).
        pooled = self.net.pooled_features(batch['inp'])
        ct_hm, focal = self.net.hm_head_and_focal(pooled, batch['ct_hm'])
        output = self.net.assemble_output(ct_hm, batch)

        pos_sum, neg_sum, num_pos = focal[0], focal[1], focal[2]
        ct_loss = jnp.where(num_pos == 0.0, -neg_sum,
                            -(pos_sum + neg_sum) / jnp.maximum(num_pos, 1.0))
        scalar_stats['ct_loss'] = ct_loss
        loss = loss + ct_loss

        num_polys = int(output['poly_init'].shape[0])
        py_pred = output['py_pred']
        n_py = len(py_pred) - 1 if self.with_dml else len(py_pred)

        # jit-friendly replacement for batch['keypoints_mask'][batch['ct_01']]
        # (assumes the true nonzero count equals num_polys, as in the reference).
        kpm = batch['keypoints_mask']
        Bk, max_ct, n_pts = kpm.shape
        idx = jnp.flatnonzero(batch['ct_01'].reshape(-1),
                              size=max(num_polys, 1))
        keyPointsMask = jnp.take(
            kpm.reshape(Bk * max_ct, n_pts).astype(jnp.float32), idx, axis=0)

        has_mask = 'mask_batch_init' in output
        has_edge = 'egde_result' in output
        n_bce_heads = 2 if has_mask else 0
        n_dice_heads = len(output['egde_result']) if has_edge else 0
        if has_mask or has_edge:
            me_stats, n_me = _mask_edge_stats(
                [output['mask_batch_init'], output['mask_batch_coarse']]
                if has_mask else [],
                batch['inp_mask'] if has_mask else None,
                list(output['egde_result']) if has_edge else [],
                batch['inp_edge'] if has_edge else None)
            tb_sum_idx = 3 * n_bce_heads
            td_sum_idx = 3 * n_bce_heads + (1 if has_mask else 0) + 2 * n_dice_heads

        def _topo(j):
            # TODO(synk): exact TopologyBceDiceLoss unavailable; BCE + soft dice.
            base = 3 * j
            bce = me_stats[base] / n_me
            dice = 1.0 - (2.0 * me_stats[base + 1] + 1.0) / (
                me_stats[base + 2] + me_stats[tb_sum_idx] + 1.0)
            return bce + dice

        with_dm = (self.with_dml and epoch >= self.start_epoch
                   and num_polys != 0 and len(py_pred) >= 2)

        if num_polys == 0:
            init_py_loss = jnp.sum(output['poly_init']) * 0.0
            coarse_py_loss = jnp.sum(output['poly_coarse']) * 0.0
            topo_loss_init = jnp.sum(output['poly_init']) * 0.0
            topo_loss_coarse = jnp.sum(output['poly_coarse']) * 0.0
            part_py_losses = [jnp.sum(py_pred[i]) * 0.0 for i in range(n_py)]
            kp_losses = None
        else:
            poly_terms = ([output['poly_init'], output['poly_coarse']]
                          + [py_pred[i] for i in range(n_py)])
            kp_heads = list(output['keypoint']) if 'keypoint' in output else []
            dm_args = None
            if with_dm:
                gt_interp = _interp_gt(output['img_gt_polys'], interp=4)
                dm_args = (py_pred[-2], py_pred[-1], gt_interp, keyPointsMask)
            small = _small_stats(poly_terms, output['img_gt_polys'],
                                 kp_heads, keyPointsMask, dm_args)
            S, K = len(poly_terms), len(kp_heads)
            poly_elems = float(output['poly_init'].size)
            init_py_loss = small[0] / poly_elems
            coarse_py_loss = small[1] / poly_elems
            part_py_losses = [small[2 + i] / poly_elems for i in range(n_py)]
            kp_elems = float(keyPointsMask.size)
            kp_losses = [small[S + j] / kp_elems for j in range(K)]
            if with_dm:
                dm_masked_sum = small[S + K]
                dm_mask_sum = small[S + K + 1]
            if has_mask:
                topo_loss_init = _topo(0)
                topo_loss_coarse = _topo(1)

        scalar_stats['init_py_loss'] = init_py_loss
        scalar_stats['coarse_py_loss'] = coarse_py_loss
        if has_mask:
            scalar_stats['topo_loss_init'] = topo_loss_init
            scalar_stats['topo_loss_coarse'] = topo_loss_coarse

        loss = loss + init_py_loss * self.weight_dict['init']
        loss = loss + coarse_py_loss * self.weight_dict['coarse']
        if has_mask:
            loss = loss + topo_loss_init * self.weight_dict['init_topo_loss']
            loss = loss + topo_loss_coarse * self.weight_dict['coarse_topo_loss']

        py_loss = jnp.float32(0.0)
        for i in range(n_py):
            part = part_py_losses[i]
            py_loss = py_loss + part / len(py_pred)
            scalar_stats['py_loss_{}'.format(i)] = part
        loss = loss + py_loss * self.weight_dict['evolve']

        if 'keypoint' in output:
            key_point_loss = jnp.float32(0.0)
            key_point_len = len(output['keypoint'])
            for i in range(key_point_len):
                if kp_losses is None:
                    part_kp = jnp.sum(output['keypoint'][i]) * 0.0
                else:
                    part_kp = kp_losses[i]
                key_point_loss = key_point_loss + part_kp / key_point_len
                scalar_stats['key_point_loss_{}'.format(i)] = part_kp
            loss = loss + key_point_loss * self.weight_dict['keypoint_evolve']

        if has_edge:
            egde_loss = jnp.float32(0.0)
            egde_num = len(output['egde_result'])
            for i in range(egde_num):
                base = 3 * n_bce_heads + (1 if has_mask else 0) + 2 * i
                # TODO(synk): exact DiceLoss unavailable; global soft dice.
                part_e = 1.0 - (2.0 * me_stats[base] + 1.0) / (
                    me_stats[base + 1] + me_stats[td_sum_idx] + 1.0)
                egde_loss = egde_loss + part_e / egde_num
                scalar_stats['egde_loss_{}'.format(i)] = part_e
            loss = loss + egde_loss * self.weight_dict['edge_evolve']

        if with_dm:
            # TODO(synk): exact e2ec DMLoss unavailable; each initial point is
            # matched to its nearest interpolated gt point (ties averaged) and
            # a key-mask-weighted smooth_l1 is applied.
            end_set_loss = dm_masked_sum / (2.0 * dm_mask_sum + 1e-4)
        else:
            end_set_loss = jnp.sum(py_pred[-1]) * 0.0
        scalar_stats['end_set_loss'] = end_set_loss
        loss = loss + (end_set_loss / len(py_pred)
                       * self.weight_dict['evolve'])

        scalar_stats['loss'] = loss
        return output, loss, scalar_stats


# ----------------------------------------------------------------------------
if __name__ == "__main__":
    key = jax.random.PRNGKey(0)
    B, H, W = 2, 32, 32
    num_classes = 4
    max_ct = 4
    num_polys = 6            # number of True entries in ct_01
    num_points = 16
    n_evolve = 4             # len(py_pred); with_dml uses the last two for DML

    ks = jax.random.split(key, 16)

    inp = jax.random.normal(ks[0], (B, 3, H, W), jnp.float32)

    gt_hm = jax.random.uniform(ks[1], (B, num_classes, H // 4, W // 4),
                               minval=0.0, maxval=0.9)
    gt_hm = gt_hm.at[:, :, 2, 3].set(1.0)          # a few exact positives
    gt_hm = gt_hm.at[0, 1, 5, 5].set(1.0)

    ct_01 = jnp.array([[True, True, True, False],
                       [True, True, False, True]])
    keypoints_mask = (jax.random.uniform(ks[2], (B, max_ct, num_points))
                      > 0.5).astype(jnp.float32)

    inp_mask = (jax.random.uniform(ks[3], (B, 1, H, W)) > 0.5).astype(jnp.float32)
    inp_edge = (jax.random.uniform(ks[4], (B, 1, H, W)) > 0.7).astype(jnp.float32)
    img_gt_polys = 4.0 * jax.random.normal(ks[5], (num_polys, num_points, 2))

    batch = {
        'inp': inp,
        'meta': {},                  # no 'test' -> training path
        'epoch': 12,                 # >= start_epoch -> DML branch
        'ct_hm': gt_hm,
        'ct_01': ct_01,
        'keypoints_mask': keypoints_mask,
        'inp_mask': inp_mask,
        'inp_edge': inp_edge,
        'img_gt_polys': img_gt_polys,
    }

    weight_dict = {
        'init': 0.1, 'coarse': 0.1, 'evolve': 1.0,
        'keypoint_evolve': 1.0, 'init_topo_loss': 0.5,
        'coarse_topo_loss': 0.5, 'edge_evolve': 0.5,
    }

    net = SyntheticNet(jax.random.PRNGKey(42), num_classes, num_polys,
                       num_points, n_evolve, n_keypoint_heads=2,
                       n_edge_heads=2, batch_size=B, hw=H)
    wrapper = NetworkWrapper(net, with_dml=True, start_epoch=10,
                             weight_dict=weight_dict)

    output, loss, scalar_stats = wrapper(batch)
    jax.block_until_ready(loss)
    jax.block_until_ready(output['ct_hm'])
    jax.block_until_ready(scalar_stats['ct_loss'])
    assert jnp.isfinite(loss)
    print("KERNEL_OK")
</pallas_src>

<mosaic_0001>
module attributes {stable_mosaic.version = 11 : i64} {
  func.func @kernel(%arg0: i32, %arg1: memref<2x3x64xf32, #tpu.memory_space<vmem>>, %arg2: memref<2x4x64xf32, #tpu.memory_space<vmem>>, %arg3: memref<3x4x1xf32, #tpu.memory_space<vmem>>, %arg4: memref<4x1xf32, #tpu.memory_space<vmem>>, %arg5: memref<2x4x64xf32, #tpu.memory_space<vmem>>, %arg6: memref<1x3xf32, #tpu.memory_space<smem>>) attributes {dimension_semantics = [#tpu.dimension_semantics<parallel>], iteration_bounds = array<i64: 1>, scalar_prefetch = 0 : i64, scratch_operands = 0 : i64, tpu.core_type = #tpu.core_type<tc>, window_params = [{transform_indices = @transform_0, window_bounds = array<i64: 2, 3, 64>}, {transform_indices = @transform_1, window_bounds = array<i64: 2, 4, 64>}, {pipeline_mode = #tpu.pipeline_mode<synchronous>, transform_indices = @transform_2, window_bounds = array<i64: 3, 4, 1>}, {pipeline_mode = #tpu.pipeline_mode<synchronous>, transform_indices = @transform_3, window_bounds = array<i64: 4, 1>}, {transform_indices = @transform_4, window_bounds = array<i64: 2, 4, 64>}, {transform_indices = @transform_5, window_bounds = array<i64: 1, 3>}]} {
    %c0 = arith.constant 0 : index
    %c0_0 = arith.constant 0 : index
    %c0_1 = arith.constant 0 : index
    %0 = vector.load %arg1[%c0, %c0_0, %c0_1] : memref<2x3x64xf32, #tpu.memory_space<vmem>>, vector<2x3x64xf32>
    %c0_2 = arith.constant 0 : index
    %c0_3 = arith.constant 0 : index
    %c0_4 = arith.constant 0 : index
    %1 = vector.load %arg2[%c0_2, %c0_3, %c0_4] : memref<2x4x64xf32, #tpu.memory_space<vmem>>, vector<2x4x64xf32>
    %c0_5 = arith.constant 0 : index
    %c0_6 = arith.constant 0 : index
    %c0_7 = arith.constant 0 : index
    %2 = vector.load %arg3[%c0_5, %c0_6, %c0_7] : memref<3x4x1xf32, #tpu.memory_space<vmem>>, vector<3x4x1xf32>
    %c0_8 = arith.constant 0 : index
    %c0_9 = arith.constant 0 : index
    %3 = vector.load %arg4[%c0_8, %c0_9] : memref<4x1xf32, #tpu.memory_space<vmem>>, vector<4x1xf32>
    %4 = vector.extract_strided_slice %0 {offsets = [0, 0, 0], sizes = [2, 1, 64], strides = [1, 1, 1]} : vector<2x3x64xf32> to vector<2x1x64xf32>
    %5 = vector.extract_strided_slice %2 {offsets = [0, 0, 0], sizes = [1, 4, 1], strides = [1, 1, 1]} : vector<3x4x1xf32> to vector<1x4x1xf32>
    %6 = vector.shape_cast %5 : vector<1x4x1xf32> to vector<4x1xf32>
    %7 = vector.shape_cast %6 : vector<4x1xf32> to vector<1x4x1xf32>
    %8 = vector.broadcast %4 : vector<2x1x64xf32> to vector<2x4x64xf32>
    %9 = vector.broadcast %7 : vector<1x4x1xf32> to vector<2x4x64xf32>
    %10 = arith.mulf %8, %9 : vector<2x4x64xf32>
    %11 = vector.extract_strided_slice %0 {offsets = [0, 1, 0], sizes = [2, 1, 64], strides = [1, 1, 1]} : vector<2x3x64xf32> to vector<2x1x64xf32>
    %12 = vector.extract_strided_slice %2 {offsets = [1, 0, 0], sizes = [1, 4, 1], strides = [1, 1, 1]} : vector<3x4x1xf32> to vector<1x4x1xf32>
    %13 = vector.shape_cast %12 : vector<1x4x1xf32> to vector<4x1xf32>
    %14 = vector.shape_cast %13 : vector<4x1xf32> to vector<1x4x1xf32>
    %15 = vector.broadcast %11 : vector<2x1x64xf32> to vector<2x4x64xf32>
    %16 = vector.broadcast %14 : vector<1x4x1xf32> to vector<2x4x64xf32>
    %17 = arith.mulf %15, %16 : vector<2x4x64xf32>
    %18 = arith.addf %10, %17 : vector<2x4x64xf32>
    %19 = vector.extract_strided_slice %0 {offsets = [0, 2, 0], sizes = [2, 1, 64], strides = [1, 1, 1]} : vector<2x3x64xf32> to vector<2x1x64xf32>
    %20 = vector.extract_strided_slice %2 {offsets = [2, 0, 0], sizes = [1, 4, 1], strides = [1, 1, 1]} : vector<3x4x1xf32> to vector<1x4x1xf32>
    %21 = vector.shape_cast %20 : vector<1x4x1xf32> to vector<4x1xf32>
    %22 = vector.shape_cast %21 : vector<4x1xf32> to vector<1x4x1xf32>
    %23 = vector.broadcast %19 : vector<2x1x64xf32> to vector<2x4x64xf32>
    %24 = vector.broadcast %22 : vector<1x4x1xf32> to vector<2x4x64xf32>
    %25 = arith.mulf %23, %24 : vector<2x4x64xf32>
    %26 = arith.addf %18, %25 : vector<2x4x64xf32>
    %27 = vector.shape_cast %3 : vector<4x1xf32> to vector<1x4x1xf32>
    %28 = vector.broadcast %27 : vector<1x4x1xf32> to vector<2x4x64xf32>
    %29 = arith.addf %26, %28 : vector<2x4x64xf32>
    %c0_10 = arith.constant 0 : index
    %c0_11 = arith.constant 0 : index
    %c0_12 = arith.constant 0 : index
    %30 = vector.load %arg5[%c0_10, %c0_11, %c0_12] : memref<2x4x64xf32, #tpu.memory_space<vmem>>, vector<2x4x64xf32>
    tpu.vector_store %arg5[%c0_10, %c0_11, %c0_12], %29 {strides = array<i32>} : memref<2x4x64xf32, #tpu.memory_space<vmem>>, vector<2x4x64xf32>,
    %cst = arith.constant 0.000000e+00 : f32
    %31 = vector.broadcast %cst : f32 to vector<2x4x64xf32>
    %32 = arith.subf %31, %29 : vector<2x4x64xf32>
    %33 = math.exp %32 : vector<2x4x64xf32>
    %cst_13 = arith.constant 1.000000e+00 : f32
    %34 = vector.broadcast %cst_13 : f32 to vector<2x4x64xf32>
    %35 = arith.addf %34, %33 : vector<2x4x64xf32>
    %cst_14 = arith.constant 1.000000e+00 : f32
    %36 = vector.broadcast %cst_14 : f32 to vector<2x4x64xf32>
    %37 = arith.divf %36, %35 : vector<2x4x64xf32>
    %cst_15 = arith.constant 9.99999974E-5 : f32
    %cst_16 = arith.constant 0.999899983 : f32
    %38 = vector.broadcast %cst_15 : f32 to vector<2x4x64xf32>
    %39 = arith.maximumf %38, %37 : vector<2x4x64xf32>
    %40 = vector.broadcast %cst_16 : f32 to vector<2x4x64xf32>
    %41 = arith.minimumf %40, %39 : vector<2x4x64xf32>
    %cst_17 = arith.constant 1.000000e+00 : f32
    %42 = vector.broadcast %cst_17 : f32 to vector<2x4x64xf32>
    %43 = arith.cmpf oeq, %1, %42 : vector<2x4x64xf32>
    %44 = arith.extui %43 : vector<2x4x64xi1> to vector<2x4x64xi32>
    %45 = arith.sitofp %44 : vector<2x4x64xi32> to vector<2x4x64xf32>
    %cst_18 = arith.constant 1.000000e+00 : f32
    %46 = vector.broadcast %cst_18 : f32 to vector<2x4x64xf32>
    %47 = arith.cmpf olt, %1, %46 : vector<2x4x64xf32>
    %48 = arith.extui %47 : vector<2x4x64xi1> to vector<2x4x64xi32>
    %49 = arith.sitofp %48 : vector<2x4x64xi32> to vector<2x4x64xf32>
    %cst_19 = arith.constant 1.000000e+00 : f32
    %50 = vector.broadcast %cst_19 : f32 to vector<2x4x64xf32>
    %51 = arith.subf %50, %1 : vector<2x4x64xf32>
    %52 = arith.mulf %51, %51 : vector<2x4x64xf32>
    %53 = arith.mulf %52, %52 : vector<2x4x64xf32>
    %54 = math.log %41 : vector<2x4x64xf32>
    %cst_20 = arith.constant 1.000000e+00 : f32
    %55 = vector.broadcast %cst_20 : f32 to vector<2x4x64xf32>
    %56 = arith.subf %55, %41 : vector<2x4x64xf32>
    %57 = arith.mulf %56, %56 : vector<2x4x64xf32>
    %58 = arith.mulf %54, %57 : vector<2x4x64xf32>
    %59 = arith.mulf %58, %45 : vector<2x4x64xf32>
    %60 = vector.shape_cast %59 : vector<2x4x64xf32> to vector<1x2x4x64xf32>
    %cst_21 = arith.constant dense<0.000000e+00> : vector<1xf32>
    %61 = vector.multi_reduction <add>, %60, %cst_21 [1, 2, 3] : vector<1x2x4x64xf32> to vector<1xf32>
    %62 = vector.shape_cast %61 : vector<1xf32> to vector<1x1x1x1xf32>
    %63 = vector.extract %62[0, 0, 0, 0] : f32 from vector<1x1x1x1xf32>
    %c0_22 = arith.constant 0 : index
    %c0_23 = arith.constant 0 : index
    %64 = memref.load %arg6[%c0_22, %c0_23] : memref<1x3xf32, #tpu.memory_space<smem>>
    memref.store %63, %arg6[%c0_22, %c0_23] : memref<1x3xf32, #tpu.memory_space<smem>>
    %cst_24 = arith.constant 1.000000e+00 : f32
    %65 = vector.broadcast %cst_24 : f32 to vector<2x4x64xf32>
    %66 = arith.subf %65, %41 : vector<2x4x64xf32>
    %67 = math.log %66 : vector<2x4x64xf32>
    %68 = arith.mulf %41, %41 : vector<2x4x64xf32>
    %69 = arith.mulf %67, %68 : vector<2x4x64xf32>
    %70 = arith.mulf %69, %53 : vector<2x4x64xf32>
    %71 = arith.mulf %70, %49 : vector<2x4x64xf32>
    %72 = vector.shape_cast %71 : vector<2x4x64xf32> to vector<1x2x4x64xf32>
    %cst_25 = arith.constant dense<0.000000e+00> : vector<1xf32>
    %73 = vector.multi_reduction <add>, %72, %cst_25 [1, 2, 3] : vector<1x2x4x64xf32> to vector<1xf32>
    %74 = vector.shape_cast %73 : vector<1xf32> to vector<1x1x1x1xf32>
    %75 = vector.extract %74[0, 0, 0, 0] : f32 from vector<1x1x1x1xf32>
    %c0_26 = arith.constant 0 : index
    %c1 = arith.constant 1 : index
    %76 = memref.load %arg6[%c0_26, %c1] : memref<1x3xf32, #tpu.memory_space<smem>>
    memref.store %75, %arg6[%c0_26, %c1] : memref<1x3xf32, #tpu.memory_space<smem>>
    %77 = vector.shape_cast %45 : vector<2x4x64xf32> to vector<1x2x4x64xf32>
    %cst_27 = arith.constant dense<0.000000e+00> : vector<1xf32>
    %78 = vector.multi_reduction <add>, %77, %cst_27 [1, 2, 3] : vector<1x2x4x64xf32> to vector<1xf32>
    %79 = vector.shape_cast %78 : vector<1xf32> to vector<1x1x1x1xf32>
    %80 = vector.extract %79[0, 0, 0, 0] : f32 from vector<1x1x1x1xf32>
    %c0_28 = arith.constant 0 : index
    %c2 = arith.constant 2 : index
    %81 = memref.load %arg6[%c0_28, %c2] : memref<1x3xf32, #tpu.memory_space<smem>>
    memref.store %80, %arg6[%c0_28, %c2] : memref<1x3xf32, #tpu.memory_space<smem>>
    return
  }
  func.func @transform_0(%arg0: i32) -> (i32, i32, i32) {
    %c0_i32 = arith.constant 0 : i32
    %c0_i32_0 = arith.constant 0 : i32
    %c0_i32_1 = arith.constant 0 : i32
    return %arg0, %c0_i32, %c0_i32_0 : i32, i32, i32
  }
  func.func @transform_1(%arg0: i32) -> (i32, i32, i32) {
    %c0_i32 = arith.constant 0 : i32
    %c0_i32_0 = arith.constant 0 : i32
    %c0_i32_1 = arith.constant 0 : i32
    return %arg0, %c0_i32, %c0_i32_0 : i32, i32, i32
  }
  func.func @transform_2(%arg0: i32) -> (i32, i32, i32) {
    %c0_i32 = arith.constant 0 : i32
    %c0_i32_0 = arith.constant 0 : i32
    %c0_i32_1 = arith.constant 0 : i32
    %c0_i32_2 = arith.constant 0 : i32
    return %c0_i32, %c0_i32_0, %c0_i32_1 : i32, i32, i32
  }
  func.func @transform_3(%arg0: i32) -> (i32, i32) {
    %c0_i32 = arith.constant 0 : i32
    %c0_i32_0 = arith.constant 0 : i32
    %c0_i32_1 = arith.constant 0 : i32
    return %c0_i32, %c0_i32_0 : i32, i32
  }
  func.func @transform_4(%arg0: i32) -> (i32, i32, i32) {
    %c0_i32 = arith.constant 0 : i32
    %c0_i32_0 = arith.constant 0 : i32
    %c0_i32_1 = arith.constant 0 : i32
    return %arg0, %c0_i32, %c0_i32_0 : i32, i32, i32
  }
  func.func @transform_5(%arg0: i32) -> (i32, i32) {
    %c0_i32 = arith.constant 0 : i32
    %c0_i32_0 = arith.constant 0 : i32
    return %arg0, %c0_i32 : i32, i32
  }
}

</mosaic_0001>

<llo_original>
// kernel: tpu_custom_call.1
$region0: #{tpu_custom_call.1}
  #allocation0 [shape = 'u32[]', space=smem, size = 0x4, offset = 0x4, fixed_abs, tag = 'smem constant byte address 0x4 - core index']
  #allocation1 [shape = 'u32[144,128]{1,0:T(1,128)}', space=vmem, size = 0x12000, scoped, tag = 'internal scratch']
  %s0 = inlined_call_operand.vmem [shape: f32[2,3,64], index: 0, kind: input, shape index: {}]
  %s1 = inlined_call_operand.vmem [shape: f32[2,4,64], index: 1, kind: input, shape index: {}]
  %s2 = inlined_call_operand.vmem [shape: f32[3,4,1], index: 2, kind: input, shape index: {}]
  %s3 = inlined_call_operand.vmem [shape: f32[4,1], index: 3, kind: input, shape index: {}]
  %s4 = inlined_call_operand.hbm [shape: f32[2,4,64], index: 4, kind: output, shape index: {0}]
  %s5 = inlined_call_operand.hbm [shape: f32[1,3], index: 5, kind: output, shape index: {1}]
  %6 = xla_tuple %s4, %s5
  %s7 = sld [smem:[#allocation0]]
  $region34: #{tpu_custom_call.1} parent=0
    _
  %s9 = ssub.s32 1, %s7
  %s10 = scalar_select 0, %s9, %s7
  $region1: #{tpu_custom_call.1} parent=0
    #allocation2 [shape = 'u8[4096]{0}', space=vmem, size = 0x1000, scoped, tag = 'output window, operand 0, single buffered']
    #allocation3 [shape = 's32[1]{0}', space=sflag, size = 0x4, scoped, tag = 'scoped memory for tpu_custom_call.1']
    #allocation4 [shape = 's32[1]{0}', space=sflag, size = 0x4, scoped, tag = 'scoped memory for tpu_custom_call.1']
    #allocation5 [shape = 'u8[512]{0}', space=smem, size = 0x200, scoped, tag = 'output window, operand 1, single buffered']
    %11 = vsyncpa [#allocation3], 0
    %12 = vsyncpa [#allocation4], 0
    // Predicated region
    $region2: #{tpu_custom_call.1} parent=1 // pred_check
      _
    $region3: #{tpu_custom_call.1} parent=1 // pred_check_branch
      %14 = sbr.rel (0) target = $region5
    $region4: #{tpu_custom_call.1} parent=1 // pred_region
      _
    $region5: #{tpu_custom_call.1} parent=1 // pred_fallthru
      _
    // Predicated region
    $region6: #{tpu_custom_call.1} parent=1 // pred_check
      _
    $region7: #{tpu_custom_call.1} parent=1 // pred_check_branch
      %16 = sbr.rel (0) target = $region9
    $region8: #{tpu_custom_call.1} parent=1 // pred_region
      _
    $region9: #{tpu_custom_call.1} parent=1 // pred_fallthru
      _
    // Predicated region
    $region10: #{tpu_custom_call.1} parent=1 // pred_check
      _
    $region11: #{tpu_custom_call.1} parent=1 // pred_check_branch
      %18 = sbr.rel (0) target = $region13
    $region12: #{tpu_custom_call.1} parent=1 // pred_region
      _
    $region13: #{tpu_custom_call.1} parent=1 // pred_fallthru
      _
    // Predicated region
    $region14: #{tpu_custom_call.1} parent=1 // pred_check
      _
    $region15: #{tpu_custom_call.1} parent=1 // pred_check_branch
      %20 = sbr.rel (0) target = $region17
    $region16: #{tpu_custom_call.1} parent=1 // pred_region
      _
    $region17: #{tpu_custom_call.1} parent=1 // pred_fallthru
      _
    %v21 = vld [vmem:[%s0] sm:$0x7]
    %v22 = vld [vmem:[%s0 + $0x4] sm:$0x7]
    %v23 = vld [vmem:[%s1] sm:$0xf]
    %v24 = vld [vmem:[%s1 + $0x4] sm:$0xf]
    %v25 = vld [vmem:[%s2] sm:$0xf]
    %v26 = vld [vmem:[%s2 + $0x4] sm:$0xf]
    %v27 = vld [vmem:[%s2 + $0x8] sm:$0xf]
    %v28 = vld [vmem:[%s3] sm:$0xf]
    %v29 = vlaneseq
    %v30 = vshrl.u32 %v29, 7
    %v31 = vsub.s32 0, %v30
    %v32 = vrot.slane %v21, %v31
    %v33 = vlaneseq
    %v34 = vshrl.u32 %v33, 7
    %v35 = vsub.s32 0, %v34
    %v36 = vrot.slane %v22, %v35
    %38 = vset.pattern.permute.xlu0 0
    %39 = vperm.xlu0 %38, %v25
    %v40 = vpop.permute.xlu0 %39
    %v42 = vmul.f32 %v32, %v40
    %v43 = vmul.f32 %v36, %v40
    %v44 = vlaneseq
    %v45 = vshrl.u32 %v44, 7
    %v46 = vsub.s32 1, %v45
    %v47 = vrot.slane %v21, %v46
    %v48 = vlaneseq
    %v49 = vshrl.u32 %v48, 7
    %v50 = vsub.s32 1, %v49
    %v51 = vrot.slane %v22, %v50
    %53 = vset.pattern.permute.xlu0 0
    %54 = vperm.xlu0 %53, %v26
    %v55 = vpop.permute.xlu0 %54
    %v57 = vmul.f32 %v47, %v55
    %v58 = vmul.f32 %v51, %v55
    %v59 = vadd.f32 %v42, %v57
    %v60 = vadd.f32 %v43, %v58
    %v61 = vlaneseq
    %v62 = vshrl.u32 %v61, 7
    %v63 = vsub.s32 2, %v62
    %v64 = vrot.slane %v21, %v63
    %v65 = vlaneseq
    %v66 = vshrl.u32 %v65, 7
    %v67 = vsub.s32 2, %v66
    %v68 = vrot.slane %v22, %v67
    %70 = vset.pattern.permute.xlu0 0
    %71 = vperm.xlu0 %70, %v27
    %v72 = vpop.permute.xlu0 %71
    %v74 = vmul.f32 %v64, %v72
    %v75 = vmul.f32 %v68, %v72
    %v76 = vadd.f32 %v59, %v74
    %v77 = vadd.f32 %v60, %v75
    %79 = vset.pattern.permute.xlu0 0
    %80 = vperm.xlu0 %79, %v28
    %v81 = vpop.permute.xlu0 %80
    %v83 = vadd.f32 %v76, %v81
    %v84 = vadd.f32 %v77, %v81
    %vm85 = vcmask 519168
    %86 = vst.msk [vmem:[#allocation2] sm:$0xf] %vm85, %v83
    %87 = vst.msk [vmem:[#allocation2 + $0x4] sm:$0xf] %vm85, %v84
    %v88 = vsub.f32 0.0, %v83
    %v89 = vsub.f32 0.0, %v84
    %v90 = vmul.f32 %v88, 1.442695
    %v91 = vpow.pop %v90
    %v92 = vmul.f32 %v89, 1.442695
    %v93 = vpow.pop %v92
    %v94 = vadd.f32 %v91, 1.0
    %v95 = vadd.f32 %v93, 1.0
    %v96 = vrcp.pop %v94
    %v97 = vmul.f32 1.0, %v96
    %v98 = vrcp.pop %v95
    %v99 = vmul.f32 1.0, %v98
    %v100 = vmax.f32 %v97, 0.0001
    %v101 = vmax.f32 %v99, 0.0001
    %v102 = vmin.f32 %v100, 0.9999
    %v103 = vmin.f32 %v101, 0.9999
    %vm104 = vcmp.eq.f32.partialorder %v23, 1.0
    %vm105 = vcmp.eq.f32.partialorder %v24, 1.0
    %v106 = vsel %vm104, 1, 0
    %v107 = vsel %vm105, 1, 0
    %v108 = vcvt.s32.f32 %v106
    %v109 = vcvt.s32.f32 %v107
    %vm110 = vcmp.lt.f32.partialorder %v23, 1.0
    %vm111 = vcmp.lt.f32.partialorder %v24, 1.0
    %v112 = vsel %vm110, 1, 0
    %v113 = vsel %vm111, 1, 0
    %v114 = vcvt.s32.f32 %v112
    %v115 = vcvt.s32.f32 %v113
    %v116 = vsub.f32 1.0, %v23
    %v117 = vsub.f32 1.0, %v24
    %v118 = vmul.f32 %v116, %v116
    %v119 = vmul.f32 %v117, %v117
    %v120 = vmul.f32 %v118, %v118
    %v121 = vmul.f32 %v119, %v119
    %v122 = vlog2.pop %v102
    %v123 = vmul.f32 %v122, 0.6931472
    %v124 = vlog2.pop %v103
    %v125 = vmul.f32 %v124, 0.6931472
    %v126 = vsub.f32 1.0, %v102
    %v127 = vsub.f32 1.0, %v103
    %v128 = vmul.f32 %v126, %v126
    %v129 = vmul.f32 %v127, %v127
    %v130 = vmul.f32 %v123, %v128
    %v131 = vmul.f32 %v125, %v129
    %v132 = vmul.f32 %v130, %v108
    %v133 = vmul.f32 %v131, %v109
    %v134 = vsel %vm85, %v132, 0.0
    %v135 = vsel %vm85, %v133, 0.0
    %v136 = vadd.f32 %v134, %v135
    %137 = vadd.xlane.f32.xlu0 %v136
    %v138 = vpop.xlane.xlu0 %137
    %v139 = vrot.slane %v138, 4
    %v140 = vadd.f32 %v138, %v139
    %v141 = vrot.slane %v140, 2
    %v142 = vadd.f32 %v140, %v141
    %v143 = vrot.slane %v142, 1
    %v144 = vadd.f32 %v142, %v143
    %s145 = vtos %v144
    %s146 = scalar_lea.smem [#allocation5], 0
    %147 = sst [smem:[%s146]] %s145
    %v148 = vlog2.pop %v126
    %v149 = vmul.f32 %v148, 0.6931472
    %v150 = vlog2.pop %v127
    %v151 = vmul.f32 %v150, 0.6931472
    %v152 = vmul.f32 %v102, %v102
    %v153 = vmul.f32 %v103, %v103
    %v154 = vmul.f32 %v149, %v152
    %v155 = vmul.f32 %v151, %v153
    %v156 = vmul.f32 %v154, %v120
    %v157 = vmul.f32 %v155, %v121
    %v158 = vmul.f32 %v156, %v114
    %v159 = vmul.f32 %v157, %v115
    %v160 = vsel %vm85, %v158, 0.0
    %v161 = vsel %vm85, %v159, 0.0
    %v162 = vadd.f32 %v160, %v161
    %163 = vadd.xlane.f32.xlu0 %v162
    %v164 = vpop.xlane.xlu0 %163
    %v165 = vrot.slane %v164, 4
    %v166 = vadd.f32 %v164, %v165
    %v167 = vrot.slane %v166, 2
    %v168 = vadd.f32 %v166, %v167
    %v169 = vrot.slane %v168, 1
    %v170 = vadd.f32 %v168, %v169
    %s171 = vtos %v170
    %s172 = scalar_lea.smem [#allocation5], 1
    %173 = sst [smem:[%s172]] %s171
    %v174 = vsel %vm85, %v108, 0.0
    %v175 = vsel %vm85, %v109, 0.0
    %v176 = vadd.f32 %v174, %v175
    %177 = vadd.xlane.f32.xlu0 %v176
    %v178 = vpop.xlane.xlu0 %177
    %v179 = vrot.slane %v178, 4
    %v180 = vadd.f32 %v178, %v179
    %v181 = vrot.slane %v180, 2
    %v182 = vadd.f32 %v180, %v181
    %v183 = vrot.slane %v182, 1
    %v184 = vadd.f32 %v182, %v183
    %s185 = vtos %v184
    %s186 = scalar_lea.smem [#allocation5], 2
    %187 = sst [smem:[%s186]] %s185
    // Predicated region
    $region18: #{tpu_custom_call.1} parent=1 // pred_check
      _
    $region19: #{tpu_custom_call.1} parent=1 // pred_check_branch
      %189 = sbr.rel (0) target = $region21
    $region20: #{tpu_custom_call.1} parent=1 // pred_region
      %s191 = ssub.s32 128, 128
      %192 = vsyncadd [#allocation3], %s191
      %s193 = sshll.u32 [#allocation2], 4
      %s194 = int_to_ptr.vmem [resolvable:$true] %s193
      %199 = dma.vmem_to_hbm [thread:$0]  %s194, 128, %s4, [#allocation3], 64, 64, 4
    $region21: #{tpu_custom_call.1} parent=1 // pred_fallthru
      _
    // Predicated region
    $region22: #{tpu_custom_call.1} parent=1 // pred_check
      _
    $region23: #{tpu_custom_call.1} parent=1 // pred_check_branch
      %201 = sbr.rel (0) target = $region25
    $region24: #{tpu_custom_call.1} parent=1 // pred_region
      %s203 = ssub.s32 16, 16
      %204 = vsyncadd [#allocation4], %s203
      %207 = dma.smem_to_hbm [#allocation5], 16, %s5, [#allocation4]
    $region25: #{tpu_custom_call.1} parent=1 // pred_fallthru
      _
    // Predicated region
    $region26: #{tpu_custom_call.1} parent=1 // pred_check
      _
    $region27: #{tpu_custom_call.1} parent=1 // pred_check_branch
      %209 = sbr.rel (0) target = $region29
    $region28: #{tpu_custom_call.1} parent=1 // pred_region
      %210 = dma.done [#allocation3], 128
    $region29: #{tpu_custom_call.1} parent=1 // pred_fallthru
      _
    // Predicated region
    $region30: #{tpu_custom_call.1} parent=1 // pred_check
      _
    $region31: #{tpu_custom_call.1} parent=1 // pred_check_branch
      %212 = sbr.rel (0) target = $region33
    $region32: #{tpu_custom_call.1} parent=1 // pred_region
      %213 = dma.done [#allocation4], 16
    $region33: #{tpu_custom_call.1} parent=1 // pred_fallthru
      _
    %214 = sfence
    %215 = vsyncpa [#allocation3], 1
    %216 = vsyncpa [#allocation4], 1

</llo_original>
